<compile_context>
chip_gen: v7x
topology: tpu7x:2x2x1
jax: 0.10.0
libtpu: 0.0.40
codegen_flags: <defaults>
</compile_context>

<pallas_src>
import functools

import jax
import jax.numpy as jnp
from jax.experimental import pallas as pl
from jax.experimental.pallas import tpu as pltpu


def _round_up(x, m):
    return ((x + m - 1) // m) * m


# --------------------- Kernel A: per-atom GEMMs (tiled over atoms) ---------------------
def _gemm_kernel(x_ref, w1_ref, b1_ref, w2_ref, b2_ref, w3_ref, b3_ref,
                 q_ref, wa_ref, *, hp, o):
    """
    x_ref : (tn, Fp)  bf16 atom features tile
    w1/b1 : (Fp, Hp) bf16 / (1, Hp) f32        base FFN linear
    w2/b2 : (Hp, C2) bf16 / (1, C2) f32        fused [Ww1 | Wr] linear
    w3/b3 : (Hp, 128) bf16 / (1, 128) f32      weights_readout L2 (col 0 real)
    q_ref : (tn, O)  f32   readout prediction per atom
    wa_ref: (tn, 1)  f32   attention logit per atom
    """
    x = x_ref[...]
    h = jnp.dot(x, w1_ref[...], preferred_element_type=jnp.float32) + b1_ref[...]
    h = jnp.maximum(h, 0.0)                                            # (tn, Hp) f32

    # Fused second GEMM: columns [0:Hp] -> weights-head hidden, [Hp:Hp+O] -> q.
    z = jnp.dot(h.astype(jnp.bfloat16), w2_ref[...],
                preferred_element_type=jnp.float32) + b2_ref[...]      # (tn, C2)
    hw = jnp.maximum(z[:, :hp], 0.0)
    q = z[:, hp:hp + o]

    wa = jnp.dot(hw.astype(jnp.bfloat16), w3_ref[...],
                 preferred_element_type=jnp.float32) + b3_ref[...]     # (tn, 128)
    q_ref[...] = q
    wa_ref[...] = wa[:, :1]


# ------------------ Kernel B: per-molecule softmax constraint (no mask) ------------------
def _constraint_kernel(starts_ref, sizes_ref, cons_ref, q_ref, wa_ref, out_ref,
                       *, max_mol, num_mols):
    """
    starts/sizes : (M,) int32 in SMEM — contiguous atom slice per molecule
    cons         : (M,) f32  in SMEM — per-molecule constraint Q
    q_ref        : (Np, O) f32 VMEM, wa_ref: (Np, 1) f32 VMEM
    out_ref      : (Np, O) f32 VMEM — constrained per-atom prediction
    Molecules are processed in increasing-start order; each writes a fixed-size
    masked window, so any scribble past its own atoms is overwritten by the owner.
    """
    out_ref[...] = jnp.zeros_like(out_ref)
    row_ids = jax.lax.broadcasted_iota(jnp.int32, (max_mol, 1), 0)
    neg_big = jnp.float32(-1e30)

    def body(m, carry):
        start = starts_ref[m]
        size = sizes_ref[m]
        Q = cons_ref[m]

        q = q_ref[pl.ds(start, max_mol), :]           # (max_mol, O)
        wa = wa_ref[pl.ds(start, max_mol), :]         # (max_mol, 1)
        valid = row_ids < size                        # (max_mol, 1)

        # masked, numerically-stable softmax over the molecule's atoms
        mx = jnp.max(jnp.where(valid, wa, neg_big), axis=0, keepdims=True)
        e = jnp.exp(jnp.where(valid, wa - mx, neg_big))        # invalid rows -> 0
        den = jnp.sum(e, axis=0, keepdims=True)                # (1, 1), >= 1
        r = pl.reciprocal(den, approx=True)
        r = r * (2.0 - den * r)                                # Newton step -> ~f32 acc.
        w = e * r

        q_rows = jnp.sum(jnp.where(valid, q, 0.0), axis=1, keepdims=True)
        q_sum = jnp.sum(q_rows, axis=0, keepdims=True)          # (1, 1)

        q_f = q + w * (Q - q_sum)
        out_ref[pl.ds(start, max_mol), :] = jnp.where(valid, q_f, 0.0)
        return carry

    jax.lax.fori_loop(0, num_mols, body, 0)


# ------------------------------------ wrapper ------------------------------------
def ffn_atten_pallas(a_hidden, params, scope, constraints, *, tile_n=512):
    """Full FFNAtten hot path. Returns the concatenated in-scope per-atom output,
    matching torch.cat(constrained_output) semantics."""
    f32, bf16 = jnp.float32, jnp.bfloat16
    N, F = a_hidden.shape
    H = params["w1"].shape[1]
    O = params["wr"].shape[1]

    scope_nz = [(int(s), int(z)) for (s, z) in scope if z > 0]
    keep = [i for i, (_, z) in enumerate(scope) if z > 0]
    if not scope_nz:
        return jnp.zeros((0, O), f32)

    Fp = _round_up(F, 128)
    Hp = _round_up(H, 128)
    C2 = _round_up(Hp + O, 128)

    max_mol = _round_up(max(z for _, z in scope_nz), 8)
    n_need = N + max_mol                             # room for window overhang
    tn = min(tile_n, _round_up(n_need, 16))          # bf16-friendly sublane tiling
    n_pad = _round_up(n_need, tn)

    # --- zero-pad & cast (padding does not change the math) ---
    x = jnp.zeros((n_pad, Fp), f32).at[:N, :F].set(a_hidden).astype(bf16)
    w1 = jnp.zeros((Fp, Hp), f32).at[:F, :H].set(params["w1"]).astype(bf16)
    b1 = jnp.zeros((1, Hp), f32).at[:, :H].set(params["b1"])
    w2 = (jnp.zeros((Hp, C2), f32)
          .at[:H, :H].set(params["ww1"])
          .at[:H, Hp:Hp + O].set(params["wr"]).astype(bf16))
    b2 = (jnp.zeros((1, C2), f32)
          .at[:, :H].set(params["bw1"])
          .at[:, Hp:Hp + O].set(params["br"]))
    w3 = jnp.zeros((Hp, 128), f32).at[:H, :1].set(params["ww2"]).astype(bf16)
    b3 = jnp.zeros((1, 128), f32).at[:, :1].set(params["bw2"])

    grid = (n_pad // tn,)
    flops = 2 * n_pad * (Fp * Hp + Hp * C2 + Hp * 128)
    bytes_accessed = (n_pad * Fp * 2 + (Fp * Hp + Hp * C2 + Hp * 128) * 2
                      + n_pad * (O + 1) * 4)

    q_full, wa_full = pl.pallas_call(
        functools.partial(_gemm_kernel, hp=Hp, o=O),
        out_shape=(jax.ShapeDtypeStruct((n_pad, O), f32),
                   jax.ShapeDtypeStruct((n_pad, 1), f32)),
        grid=grid,
        in_specs=[
            pl.BlockSpec((tn, Fp), lambda i: (i, 0)),     # atom tiles stream through
            pl.BlockSpec((Fp, Hp), lambda i: (0, 0)),     # weights stay resident
            pl.BlockSpec((1, Hp), lambda i: (0, 0)),
            pl.BlockSpec((Hp, C2), lambda i: (0, 0)),
            pl.BlockSpec((1, C2), lambda i: (0, 0)),
            pl.BlockSpec((Hp, 128), lambda i: (0, 0)),
            pl.BlockSpec((1, 128), lambda i: (0, 0)),
        ],
        out_specs=(pl.BlockSpec((tn, O), lambda i: (i, 0)),
                   pl.BlockSpec((tn, 1), lambda i: (i, 0))),
        compiler_params=pltpu.CompilerParams(
            dimension_semantics=("parallel",),            # megacore shard on v7x
            vmem_limit_bytes=32 * 1024 * 1024),
        cost_estimate=pl.CostEstimate(flops=flops, transcendentals=0,
                                      bytes_accessed=bytes_accessed),
    )(x, w1, b1, w2, b2, w3, b3)

    # --- per-molecule constraint pass: offsets & constraints in SMEM ---
    starts = jnp.asarray([s for s, _ in scope_nz], jnp.int32)
    sizes = jnp.asarray([z for _, z in scope_nz], jnp.int32)
    cons = jnp.asarray(constraints, f32).reshape(-1)[jnp.asarray(keep, jnp.int32)]

    smem = pl.BlockSpec(memory_space=pltpu.MemorySpace.SMEM)
    vmem = pl.BlockSpec(memory_space=pltpu.MemorySpace.VMEM)
    out_pad = pl.pallas_call(
        functools.partial(_constraint_kernel, max_mol=max_mol,
                          num_mols=len(scope_nz)),
        out_shape=jax.ShapeDtypeStruct((n_pad, O), f32),
        in_specs=[smem, smem, smem, vmem, vmem],
        out_specs=vmem,
    )(starts, sizes, cons, q_full, wa_full)

    # torch.cat(constrained_output): keep only in-scope atoms, in order.
    idx = jnp.asarray([r for (s, z) in scope_nz for r in range(s, s + z)],
                      jnp.int32)
    return out_pad[idx]


# ------------------------------------ reference ------------------------------------
def ffn_atten_reference(a_hidden, params, scope, constraints):
    """Plain-JAX reference mirroring FFNAtten.readout (same bf16-operand matmul
    policy as the kernel, f32 accumulation, exact softmax)."""
    bf16, f32 = jnp.bfloat16, jnp.float32

    def mm(a, b):
        return jnp.dot(a.astype(bf16), b.astype(bf16), preferred_element_type=f32)

    h = jnp.maximum(mm(a_hidden, params["w1"]) + params["b1"], 0.0)
    q = mm(h, params["wr"]) + params["br"]
    hw = jnp.maximum(mm(h, params["ww1"]) + params["bw1"], 0.0)
    wa = mm(hw, params["ww2"]) + params["bw2"]
    outs = []
    for i, (start, size) in enumerate(scope):
        if size == 0:
            continue
        q_i = q[start:start + size]
        w_i = jax.nn.softmax(wa[start:start + size], axis=0)
        outs.append(q_i + w_i * (constraints[i] - q_i.sum()))
    return jnp.concatenate(outs, axis=0)


def make_params(key, features_size, hidden_size, output_size):
    """Deterministic synthetic parameters (kaiming-uniform-ish)."""
    ks = jax.random.split(key, 8)

    def lin(kw, kb, fan_in, fan_out):
        bound = 1.0 / jnp.sqrt(jnp.float32(fan_in))
        w = jax.random.uniform(kw, (fan_in, fan_out), jnp.float32, -bound, bound)
        b = jax.random.uniform(kb, (1, fan_out), jnp.float32, -bound, bound)
        return w, b

    w1, b1 = lin(ks[0], ks[1], features_size, hidden_size)   # self.ffn Linear
    wr, br = lin(ks[2], ks[3], hidden_size, output_size)     # ffn_readout Linear
    ww1, bw1 = lin(ks[4], ks[5], hidden_size, hidden_size)   # weights_readout L1
    ww2, bw2 = lin(ks[6], ks[7], hidden_size, 1)             # weights_readout L2
    return dict(w1=w1, b1=b1, wr=wr, br=br, ww1=ww1, bw1=bw1, ww2=ww2, bw2=bw2)


if __name__ == "__main__":
    # Small shapes consistent with the module (atom path):
    #   features_size = 32, hidden_size = 32, num_layers = 2, output_size = 1
    #   N_atoms = 16 (row 0 is chemprop's zero-padding row), 2 molecules.
    features_size, hidden_size, output_size = 32, 32, 1
    N_atoms = 16
    scope = [(1, 8), (9, 7)]                     # a_scope: (start, size) per molecule
    num_mols = len(scope)

    key = jax.random.PRNGKey(0)
    k_x, k_c, k_p = jax.random.split(key, 3)

    a_hidden = jax.random.normal(k_x, (N_atoms, features_size), jnp.float32)
    a_hidden = a_hidden.at[0].set(0.0)           # chemprop padding row
    constraints = jax.random.normal(k_c, (num_mols,), jnp.float32)
    params = make_params(k_p, features_size, hidden_size, output_size)

    out = ffn_atten_pallas(a_hidden, params, scope, constraints)
    out = jax.block_until_ready(out)

    ref = ffn_atten_reference(a_hidden, params, scope, constraints)
    assert out.shape == ref.shape == (15, output_size)
    assert jnp.allclose(out, ref, rtol=2e-3, atol=2e-3), "mismatch vs reference"

    print("KERNEL_OK")
</pallas_src>

<mosaic_0001>
module attributes {stable_mosaic.version = 11 : i64} {
  func.func @_gemm_kernel(%arg0: i32, %arg1: memref<32x128xbf16, #tpu.memory_space<vmem>>, %arg2: memref<128x128xbf16, #tpu.memory_space<vmem>>, %arg3: memref<1x128xf32, #tpu.memory_space<vmem>>, %arg4: memref<128x256xbf16, #tpu.memory_space<vmem>>, %arg5: memref<1x256xf32, #tpu.memory_space<vmem>>, %arg6: memref<128x128xbf16, #tpu.memory_space<vmem>>, %arg7: memref<1x128xf32, #tpu.memory_space<vmem>>, %arg8: memref<32x1xf32, #tpu.memory_space<vmem>>, %arg9: memref<32x1xf32, #tpu.memory_space<vmem>>) attributes {dimension_semantics = [#tpu.dimension_semantics<parallel>], iteration_bounds = array<i64: 1>, scalar_prefetch = 0 : i64, scratch_operands = 0 : i64, tpu.core_type = #tpu.core_type<tc>, window_params = [{transform_indices = @transform_0, window_bounds = array<i64: 32, 128>}, {pipeline_mode = #tpu.pipeline_mode<synchronous>, transform_indices = @transform_1, window_bounds = array<i64: 128, 128>}, {pipeline_mode = #tpu.pipeline_mode<synchronous>, transform_indices = @transform_2, window_bounds = array<i64: 1, 128>}, {pipeline_mode = #tpu.pipeline_mode<synchronous>, transform_indices = @transform_3, window_bounds = array<i64: 128, 256>}, {pipeline_mode = #tpu.pipeline_mode<synchronous>, transform_indices = @transform_4, window_bounds = array<i64: 1, 256>}, {pipeline_mode = #tpu.pipeline_mode<synchronous>, transform_indices = @transform_5, window_bounds = array<i64: 128, 128>}, {pipeline_mode = #tpu.pipeline_mode<synchronous>, transform_indices = @transform_6, window_bounds = array<i64: 1, 128>}, {transform_indices = @transform_7, window_bounds = array<i64: 32, 1>}, {transform_indices = @transform_8, window_bounds = array<i64: 32, 1>}]} {
    %c0 = arith.constant 0 : index
    %c0_0 = arith.constant 0 : index
    %0 = vector.load %arg1[%c0, %c0_0] : memref<32x128xbf16, #tpu.memory_space<vmem>>, vector<32x128xbf16>
    %c0_1 = arith.constant 0 : index
    %c0_2 = arith.constant 0 : index
    %1 = vector.load %arg2[%c0_1, %c0_2] : memref<128x128xbf16, #tpu.memory_space<vmem>>, vector<128x128xbf16>
    %cst = arith.constant dense<0.000000e+00> : vector<32x128xf32>
    %2 = tpu.matmul %0, %1, %cst {dimension_numbers = #tpu.dot_dimension_numbers<[1], [0], [0], [1], [0, 0, 1, 1], [], []>} : vector<32x128xbf16>, vector<128x128xbf16>, vector<32x128xf32> -> vector<32x128xf32>
    %c0_3 = arith.constant 0 : index
    %c0_4 = arith.constant 0 : index
    %3 = vector.load %arg3[%c0_3, %c0_4] : memref<1x128xf32, #tpu.memory_space<vmem>>, vector<1x128xf32>
    %4 = vector.broadcast %3 : vector<1x128xf32> to vector<32x128xf32>
    %5 = arith.addf %2, %4 : vector<32x128xf32>
    %cst_5 = arith.constant 0.000000e+00 : f32
    %6 = vector.broadcast %cst_5 : f32 to vector<32x128xf32>
    %7 = arith.maximumf %5, %6 : vector<32x128xf32>
    %8 = arith.truncf %7 : vector<32x128xf32> to vector<32x128xbf16>
    %c0_6 = arith.constant 0 : index
    %c0_7 = arith.constant 0 : index
    %9 = vector.load %arg4[%c0_6, %c0_7] : memref<128x256xbf16, #tpu.memory_space<vmem>>, vector<128x256xbf16>
    %cst_8 = arith.constant dense<0.000000e+00> : vector<32x256xf32>
    %10 = tpu.matmul %8, %9, %cst_8 {dimension_numbers = #tpu.dot_dimension_numbers<[1], [0], [0], [1], [0, 0, 1, 1], [], []>} : vector<32x128xbf16>, vector<128x256xbf16>, vector<32x256xf32> -> vector<32x256xf32>
    %c0_9 = arith.constant 0 : index
    %c0_10 = arith.constant 0 : index
    %11 = vector.load %arg5[%c0_9, %c0_10] : memref<1x256xf32, #tpu.memory_space<vmem>>, vector<1x256xf32>
    %12 = vector.broadcast %11 : vector<1x256xf32> to vector<32x256xf32>
    %13 = arith.addf %10, %12 : vector<32x256xf32>
    %14 = vector.extract_strided_slice %13 {offsets = [0, 0], sizes = [32, 128], strides = [1, 1]} : vector<32x256xf32> to vector<32x128xf32>
    %cst_11 = arith.constant 0.000000e+00 : f32
    %15 = vector.broadcast %cst_11 : f32 to vector<32x128xf32>
    %16 = arith.maximumf %14, %15 : vector<32x128xf32>
    %17 = vector.extract_strided_slice %13 {offsets = [0, 128], sizes = [32, 1], strides = [1, 1]} : vector<32x256xf32> to vector<32x1xf32>
    %18 = arith.truncf %16 : vector<32x128xf32> to vector<32x128xbf16>
    %c0_12 = arith.constant 0 : index
    %c0_13 = arith.constant 0 : index
    %19 = vector.load %arg6[%c0_12, %c0_13] : memref<128x128xbf16, #tpu.memory_space<vmem>>, vector<128x128xbf16>
    %cst_14 = arith.constant dense<0.000000e+00> : vector<32x128xf32>
    %20 = tpu.matmul %18, %19, %cst_14 {dimension_numbers = #tpu.dot_dimension_numbers<[1], [0], [0], [1], [0, 0, 1, 1], [], []>} : vector<32x128xbf16>, vector<128x128xbf16>, vector<32x128xf32> -> vector<32x128xf32>
    %c0_15 = arith.constant 0 : index
    %c0_16 = arith.constant 0 : index
    %21 = vector.load %arg7[%c0_15, %c0_16] : memref<1x128xf32, #tpu.memory_space<vmem>>, vector<1x128xf32>
    %22 = vector.broadcast %21 : vector<1x128xf32> to vector<32x128xf32>
    %23 = arith.addf %20, %22 : vector<32x128xf32>
    %c0_17 = arith.constant 0 : index
    %c0_18 = arith.constant 0 : index
    %24 = vector.load %arg8[%c0_17, %c0_18] : memref<32x1xf32, #tpu.memory_space<vmem>>, vector<32x1xf32>
    tpu.vector_store %arg8[%c0_17, %c0_18], %17 {strides = array<i32>} : memref<32x1xf32, #tpu.memory_space<vmem>>, vector<32x1xf32>,
    %25 = vector.extract_strided_slice %23 {offsets = [0, 0], sizes = [32, 1], strides = [1, 1]} : vector<32x128xf32> to vector<32x1xf32>
    %c0_19 = arith.constant 0 : index
    %c0_20 = arith.constant 0 : index
    %26 = vector.load %arg9[%c0_19, %c0_20] : memref<32x1xf32, #tpu.memory_space<vmem>>, vector<32x1xf32>
    tpu.vector_store %arg9[%c0_19, %c0_20], %25 {strides = array<i32>} : memref<32x1xf32, #tpu.memory_space<vmem>>, vector<32x1xf32>,
    return
  }
  func.func @transform_0(%arg0: i32) -> (i32, i32) {
    %c0_i32 = arith.constant 0 : i32
    %c0_i32_0 = arith.constant 0 : i32
    return %arg0, %c0_i32 : i32, i32
  }
  func.func @transform_1(%arg0: i32) -> (i32, i32) {
    %c0_i32 = arith.constant 0 : i32
    %c0_i32_0 = arith.constant 0 : i32
    %c0_i32_1 = arith.constant 0 : i32
    return %c0_i32, %c0_i32_0 : i32, i32
  }
  func.func @transform_2(%arg0: i32) -> (i32, i32) {
    %c0_i32 = arith.constant 0 : i32
    %c0_i32_0 = arith.constant 0 : i32
    %c0_i32_1 = arith.constant 0 : i32
    return %c0_i32, %c0_i32_0 : i32, i32
  }
  func.func @transform_3(%arg0: i32) -> (i32, i32) {
    %c0_i32 = arith.constant 0 : i32
    %c0_i32_0 = arith.constant 0 : i32
    %c0_i32_1 = arith.constant 0 : i32
    return %c0_i32, %c0_i32_0 : i32, i32
  }
  func.func @transform_4(%arg0: i32) -> (i32, i32) {
    %c0_i32 = arith.constant 0 : i32
    %c0_i32_0 = arith.constant 0 : i32
    %c0_i32_1 = arith.constant 0 : i32
    return %c0_i32, %c0_i32_0 : i32, i32
  }
  func.func @transform_5(%arg0: i32) -> (i32, i32) {
    %c0_i32 = arith.constant 0 : i32
    %c0_i32_0 = arith.constant 0 : i32
    %c0_i32_1 = arith.constant 0 : i32
    return %c0_i32, %c0_i32_0 : i32, i32
  }
  func.func @transform_6(%arg0: i32) -> (i32, i32) {
    %c0_i32 = arith.constant 0 : i32
    %c0_i32_0 = arith.constant 0 : i32
    %c0_i32_1 = arith.constant 0 : i32
    return %c0_i32, %c0_i32_0 : i32, i32
  }
  func.func @transform_7(%arg0: i32) -> (i32, i32) {
    %c0_i32 = arith.constant 0 : i32
    %c0_i32_0 = arith.constant 0 : i32
    return %arg0, %c0_i32 : i32, i32
  }
  func.func @transform_8(%arg0: i32) -> (i32, i32) {
    %c0_i32 = arith.constant 0 : i32
    %c0_i32_0 = arith.constant 0 : i32
    return %arg0, %c0_i32 : i32, i32
  }
}

</mosaic_0001>

<llo_original>
// kernel: tpu_custom_call.1
$region0: #{tpu_custom_call.1}
  #allocation0 [shape = 'u32[]', space=smem, size = 0x4, offset = 0x4, fixed_abs, tag = 'smem constant byte address 0x4 - core index']
  #allocation1 [shape = 'u32[144,128]{1,0:T(1,128)}', space=vmem, size = 0x12000, scoped, tag = 'internal scratch']
  %s0 = inlined_call_operand.hbm [shape: bf16[32,128], index: 0, kind: input, shape index: {}]
  %s1 = inlined_call_operand.hbm [shape: bf16[128,128], index: 1, kind: input, shape index: {}]
  %s2 = inlined_call_operand.vmem [shape: f32[1,128], index: 2, kind: input, shape index: {}]
  %s3 = inlined_call_operand.hbm [shape: bf16[128,256], index: 3, kind: input, shape index: {}]
  %s4 = inlined_call_operand.vmem [shape: f32[1,256], index: 4, kind: input, shape index: {}]
  %s5 = inlined_call_operand.hbm [shape: bf16[128,128], index: 5, kind: input, shape index: {}]
  %s6 = inlined_call_operand.vmem [shape: f32[1,128], index: 6, kind: input, shape index: {}]
  %s7 = inlined_call_operand.vmem [shape: f32[32,1], index: 7, kind: output, shape index: {0}]
  %s8 = inlined_call_operand.vmem [shape: f32[32,1], index: 8, kind: output, shape index: {1}]
  %9 = xla_tuple %s7, %s8
  %s10 = sld [smem:[#allocation0]]
  $region62: #{tpu_custom_call.1} parent=0
    _
  %s12 = ssub.s32 1, %s10
  %s13 = scalar_select 0, %s12, %s10
  $region1: #{tpu_custom_call.1} parent=0
    #allocation2 [shape = 'u8[8192]{0}', space=vmem, size = 0x2000, scoped, tag = 'input window, operand 0, single buffered']
    #allocation3 [shape = 's32[1]{0}', space=sflag, size = 0x4, scoped, tag = 'scoped memory for tpu_custom_call.1']
    #allocation4 [shape = 'u8[32768]{0}', space=vmem, size = 0x8000, scoped, tag = 'input window, operand 1, single buffered']
    #allocation5 [shape = 's32[1]{0}', space=sflag, size = 0x4, scoped, tag = 'scoped memory for tpu_custom_call.1']
    #allocation6 [shape = 'u8[65536]{0}', space=vmem, size = 0x10000, scoped, tag = 'input window, operand 3, single buffered']
    #allocation7 [shape = 'u8[32768]{0}', space=vmem, size = 0x8000, scoped, tag = 'input window, operand 5, single buffered']
    #allocation8 [shape = 's32[1]{0}', space=sflag, size = 0x4, scoped, tag = 'scoped memory for tpu_custom_call.1']
    %14 = vsyncpa [#allocation3], 0
    %15 = vsyncpa [#allocation5], 0
    %16 = vsyncpa [#allocation8], 0
    // Predicated region
    $region2: #{tpu_custom_call.1} parent=1 // pred_check
      _
    $region3: #{tpu_custom_call.1} parent=1 // pred_check_branch
      %18 = sbr.rel (0) target = $region5
    $region4: #{tpu_custom_call.1} parent=1 // pred_region
      %s20 = ssub.s32 256, 256
      %21 = vsyncadd [#allocation3], %s20
      %s22 = sshll.u32 [#allocation2], 4
      %s23 = int_to_ptr.vmem [resolvable:$true] %s22
      %28 = dma.hbm_to_vmem [thread:$0]  %s0, 256, %s23, [#allocation3], 64, 64, 4
    $region5: #{tpu_custom_call.1} parent=1 // pred_fallthru
      _
    // Predicated region
    $region6: #{tpu_custom_call.1} parent=1 // pred_check
      _
    $region7: #{tpu_custom_call.1} parent=1 // pred_check_branch
      %30 = sbr.rel (0) target = $region9
    $region8: #{tpu_custom_call.1} parent=1 // pred_region
      %s32 = ssub.s32 1024, 1024
      %33 = vsyncadd [#allocation5], %s32
      %s34 = sshll.u32 [#allocation4], 4
      %s35 = int_to_ptr.vmem [resolvable:$true] %s34
      %40 = dma.hbm_to_vmem [thread:$0]  %s1, 1024, %s35, [#allocation5], 64, 64, 4
    $region9: #{tpu_custom_call.1} parent=1 // pred_fallthru
      _
    // Predicated region
    $region10: #{tpu_custom_call.1} parent=1 // pred_check
      _
    $region11: #{tpu_custom_call.1} parent=1 // pred_check_branch
      %42 = sbr.rel (0) target = $region13
    $region12: #{tpu_custom_call.1} parent=1 // pred_region
      _
    $region13: #{tpu_custom_call.1} parent=1 // pred_fallthru
      _
    // Predicated region
    $region14: #{tpu_custom_call.1} parent=1 // pred_check
      _
    $region15: #{tpu_custom_call.1} parent=1 // pred_check_branch
      %44 = sbr.rel (0) target = $region17
    $region16: #{tpu_custom_call.1} parent=1 // pred_region
      %s46 = ssub.s32 2048, 2048
      %47 = vsyncadd [#allocation5], %s46
      %s48 = sshll.u32 [#allocation6], 4
      %s49 = int_to_ptr.vmem [resolvable:$true] %s48
      %54 = dma.hbm_to_vmem [thread:$0]  %s3, 2048, %s49, [#allocation5], 128, 128, 8
    $region17: #{tpu_custom_call.1} parent=1 // pred_fallthru
      _
    // Predicated region
    $region18: #{tpu_custom_call.1} parent=1 // pred_check
      _
    $region19: #{tpu_custom_call.1} parent=1 // pred_check_branch
      %56 = sbr.rel (0) target = $region21
    $region20: #{tpu_custom_call.1} parent=1 // pred_region
      _
    $region21: #{tpu_custom_call.1} parent=1 // pred_fallthru
      _
    // Predicated region
    $region22: #{tpu_custom_call.1} parent=1 // pred_check
      _
    $region23: #{tpu_custom_call.1} parent=1 // pred_check_branch
      %58 = sbr.rel (0) target = $region25
    $region24: #{tpu_custom_call.1} parent=1 // pred_region
      %s60 = ssub.s32 1024, 1024
      %61 = vsyncadd [#allocation8], %s60
      %s62 = sshll.u32 [#allocation7], 4
      %s63 = int_to_ptr.vmem [resolvable:$true] %s62
      %68 = dma.hbm_to_vmem [thread:$0]  %s5, 1024, %s63, [#allocation8], 64, 64, 4
    $region25: #{tpu_custom_call.1} parent=1 // pred_fallthru
      _
    // Predicated region
    $region26: #{tpu_custom_call.1} parent=1 // pred_check
      _
    $region27: #{tpu_custom_call.1} parent=1 // pred_check_branch
      %70 = sbr.rel (0) target = $region29
    $region28: #{tpu_custom_call.1} parent=1 // pred_region
      _
    $region29: #{tpu_custom_call.1} parent=1 // pred_fallthru
      _
    // Predicated region
    $region30: #{tpu_custom_call.1} parent=1 // pred_check
      _
    $region31: #{tpu_custom_call.1} parent=1 // pred_check_branch
      %72 = sbr.rel (0) target = $region33
    $region32: #{tpu_custom_call.1} parent=1 // pred_region
      %73 = dma.done [#allocation3], 256
    $region33: #{tpu_custom_call.1} parent=1 // pred_fallthru
      _
    // Predicated region
    $region34: #{tpu_custom_call.1} parent=1 // pred_check
      _
    $region35: #{tpu_custom_call.1} parent=1 // pred_check_branch
      %75 = sbr.rel (0) target = $region37
    $region36: #{tpu_custom_call.1} parent=1 // pred_region
      %76 = dma.done [#allocation5], 1024
    $region37: #{tpu_custom_call.1} parent=1 // pred_fallthru
      _
    // Predicated region
    $region38: #{tpu_custom_call.1} parent=1 // pred_check
      _
    $region39: #{tpu_custom_call.1} parent=1 // pred_check_branch
      %78 = sbr.rel (0) target = $region41
    $region40: #{tpu_custom_call.1} parent=1 // pred_region
      %79 = dma.done [#allocation5], 2048
    $region41: #{tpu_custom_call.1} parent=1 // pred_fallthru
      _
    // Predicated region
    $region42: #{tpu_custom_call.1} parent=1 // pred_check
      _
    $region43: #{tpu_custom_call.1} parent=1 // pred_check_branch
      %81 = sbr.rel (0) target = $region45
    $region44: #{tpu_custom_call.1} parent=1 // pred_region
      %82 = dma.done [#allocation8], 1024
    $region45: #{tpu_custom_call.1} parent=1 // pred_fallthru
      _
    %v84 = vld [vmem:[#allocation2] sm:$0xf]
    %v85 = vld [vmem:[#allocation2 + $0x4] sm:$0xf]
    %v86 = vld [vmem:[#allocation2 + $0x8] sm:$0xf]
    %v87 = vld [vmem:[#allocation2 + $0xc] sm:$0xf]
    %v88 = vld [vmem:[#allocation4] sm:$0xf]
    %v89 = vld [vmem:[#allocation4 + $0x4] sm:$0xf]
    %v90 = vld [vmem:[#allocation4 + $0x8] sm:$0xf]
    %v91 = vld [vmem:[#allocation4 + $0xc] sm:$0xf]
    %v92 = vld [vmem:[#allocation4 + $0x10] sm:$0xf]
    %v93 = vld [vmem:[#allocation4 + $0x14] sm:$0xf]
    %v94 = vld [vmem:[#allocation4 + $0x18] sm:$0xf]
    %v95 = vld [vmem:[#allocation4 + $0x1c] sm:$0xf]
    %v96 = vld [vmem:[#allocation4 + $0x20] sm:$0xf]
    %v97 = vld [vmem:[#allocation4 + $0x24] sm:$0xf]
    %v98 = vld [vmem:[#allocation4 + $0x28] sm:$0xf]
    %v99 = vld [vmem:[#allocation4 + $0x2c] sm:$0xf]
    %v100 = vld [vmem:[#allocation4 + $0x30] sm:$0xf]
    %v101 = vld [vmem:[#allocation4 + $0x34] sm:$0xf]
    %v102 = vld [vmem:[#allocation4 + $0x38] sm:$0xf]
    %v103 = vld [vmem:[#allocation4 + $0x3c] sm:$0xf]
    %v104 = vld [vmem:[%s2] sm:$0x1]
    %v106 = vlaneseq
    %v107 = vshrl.u32 %v106, 7
    %v108 = vsub.s32 0, %v107
    %v109 = vrot.slane %v104, %v108
    %v115 = vunpack.c.l.b16 %v84
    %v116 = vunpack.c.l.b16 %v85
    %v117 = vunpack.c.l.b16 %v86
    %v118 = vunpack.c.l.b16 %v87
    %v119 = vpack.c.b16 %v116, %v115
    %v120 = vpack.c.b16 %v118, %v117
    %v139 = vunpack.c.l.b16 %v88
    %v140 = vunpack.c.l.b16 %v89
    %v141 = vunpack.c.l.b16 %v90
    %v142 = vunpack.c.l.b16 %v91
    %v143 = vunpack.c.l.b16 %v92
    %v144 = vunpack.c.l.b16 %v93
    %v145 = vunpack.c.l.b16 %v94
    %v146 = vunpack.c.l.b16 %v95
    %v147 = vunpack.c.l.b16 %v96
    %v148 = vunpack.c.l.b16 %v97
    %v149 = vunpack.c.l.b16 %v98
    %v150 = vunpack.c.l.b16 %v99
    %v151 = vunpack.c.l.b16 %v100
    %v152 = vunpack.c.l.b16 %v101
    %v153 = vunpack.c.l.b16 %v102
    %v154 = vunpack.c.l.b16 %v103
    %v155 = vpack.c.b16 %v140, %v139
    %v156 = vpack.c.b16 %v142, %v141
    %v157 = vpack.c.b16 %v144, %v143
    %v158 = vpack.c.b16 %v146, %v145
    %v159 = vpack.c.b16 %v148, %v147
    %v160 = vpack.c.b16 %v150, %v149
    %v161 = vpack.c.b16 %v152, %v151
    %v162 = vpack.c.b16 %v154, %v153
    %171 = vmatprep.subr.bf16.mxu0 0
    %172 = vmatpush1.bf16.msra.mxu0 %v155
    %173 = vmatprep.subr.bf16.mxu0 0
    %174 = vmatpush1.bf16.msra.mxu0 %v156
    %175 = vmatprep.subr.bf16.mxu0 0
    %176 = vmatpush1.bf16.msra.mxu0 %v157
    %177 = vmatprep.subr.bf16.mxu0 0
    %178 = vmatpush1.bf16.msra.mxu0 %v158
    %179 = vmatprep.subr.bf16.mxu0 0
    %180 = vmatpush1.bf16.msra.mxu0 %v159
    %181 = vmatprep.subr.bf16.mxu0 0
    %182 = vmatpush1.bf16.msra.mxu0 %v160
    %183 = vmatprep.subr.bf16.mxu0 0
    %184 = vmatpush1.bf16.msra.mxu0 %v161
    %185 = vmatprep.subr.bf16.mxu0 0
    %186 = vmatpush1.bf16.msra.mxu0 %v162
    %187 = vmatprep.subr.bf16.mxu0 0
    %188 = vmatpush1.bf16.msra.mxu0 0
    %189 = vmatprep.subr.bf16.mxu0 0
    %190 = vmatpush1.bf16.msra.mxu0 0
    %191 = vmatprep.subr.bf16.mxu0 0
    %192 = vmatpush1.bf16.msra.mxu0 0
    %193 = vmatprep.subr.bf16.mxu0 0
    %194 = vmatpush1.bf16.msra.mxu0 0
    %195 = vmatprep.subr.bf16.mxu0 0
    %196 = vmatpush1.bf16.msra.mxu0 0
    %197 = vmatprep.subr.bf16.mxu0 0
    %198 = vmatpush1.bf16.msra.mxu0 0
    %199 = vmatprep.subr.bf16.mxu0 0
    %200 = vmatpush1.bf16.msra.mxu0 0
    %201 = vmatprep.subr.bf16.mxu0 0
    %202 = vmatpush1.bf16.msra.mxu0 0
    %203 = vmatprep.mubr.bf16.mxu0 0
    %204 = vmatmul.mubr.bf16.gmra.mrb[0].mxu0 %v119
    %v205 = vpop.f32.mrb[0].mxu0
    %v206 = vadd.f32 %v109, %v205
    %v207 = vpop.f32.mrb[0].mxu0
    %v208 = vpop.f32.mrb[0].mxu0
    %v209 = vadd.f32 %v109, %v208
    %v210 = vpop.f32.mrb[0].mxu0
    %211 = vmatprep.mubr.bf16.mxu0 0
    %212 = vmatmul.mubr.bf16.gmra.mrb[0].mxu0 %v120
    %v213 = vpop.f32.mrb[0].mxu0
    %v214 = vadd.f32 %v109, %v213
    %v215 = vpop.f32.mrb[0].mxu0
    %v216 = vpop.f32.mrb[0].mxu0
    %v217 = vadd.f32 %v109, %v216
    %v218 = vpop.f32.mrb[0].mxu0
    %219 = vdwg.mxu0
    %v220 = vmax.f32 %v206, 0.0
    %v221 = vmax.f32 %v209, 0.0
    %v222 = vmax.f32 %v214, 0.0
    %v223 = vmax.f32 %v217, 0.0
    %v224 = vpack.c.bf16 %v221, %v220
    %v225 = vpack.c.bf16 %v223, %v222
    %v226 = vld [vmem:[#allocation6] sm:$0xff]
    %v227 = vld [vmem:[#allocation6 + $0x8] sm:$0xff]
    %v228 = vld [vmem:[#allocation6 + $0x10] sm:$0xff]
    %v229 = vld [vmem:[#allocation6 + $0x18] sm:$0xff]
    %v230 = vld [vmem:[#allocation6 + $0x20] sm:$0xff]
    %v231 = vld [vmem:[#allocation6 + $0x28] sm:$0xff]
    %v232 = vld [vmem:[#allocation6 + $0x30] sm:$0xff]
    %v233 = vld [vmem:[#allocation6 + $0x38] sm:$0xff]
    %v234 = vld [vmem:[#allocation6 + $0x40] sm:$0xff]
    %v235 = vld [vmem:[#allocation6 + $0x48] sm:$0xff]
    %v236 = vld [vmem:[#allocation6 + $0x50] sm:$0xff]
    %v237 = vld [vmem:[#allocation6 + $0x58] sm:$0xff]
    %v238 = vld [vmem:[#allocation6 + $0x60] sm:$0xff]
    %v239 = vld [vmem:[#allocation6 + $0x68] sm:$0xff]
    %v240 = vld [vmem:[#allocation6 + $0x70] sm:$0xff]
    %v241 = vld [vmem:[#allocation6 + $0x78] sm:$0xff]
    %v242 = vld [vmem:[%s4] sm:$0x3]
    %v244 = vlaneseq
    %v245 = vshrl.u32 %v244, 7
    %v246 = vsub.s32 0, %v245
    %v247 = vrot.slane %v242, %v246
    %v248 = vlaneseq
    %v249 = vshrl.u32 %v248, 7
    %v250 = vsub.s32 1, %v249
    %v251 = vrot.slane %v242, %v250
    %v270 = vunpack.c.l.b16 %v226
    %v271 = vunpack.c.h.b16 %v226
    %v272 = vunpack.c.l.b16 %v227
    %v273 = vunpack.c.h.b16 %v227
    %v274 = vunpack.c.l.b16 %v228
    %v275 = vunpack.c.h.b16 %v228
    %v276 = vunpack.c.l.b16 %v229
    %v277 = vunpack.c.h.b16 %v229
    %v278 = vunpack.c.l.b16 %v230
    %v279 = vunpack.c.h.b16 %v230
    %v280 = vunpack.c.l.b16 %v231
    %v281 = vunpack.c.h.b16 %v231
    %v282 = vunpack.c.l.b16 %v232
    %v283 = vunpack.c.h.b16 %v232
    %v284 = vunpack.c.l.b16 %v233
    %v285 = vunpack.c.h.b16 %v233
    %v286 = vunpack.c.l.b16 %v234
    %v287 = vunpack.c.h.b16 %v234
    %v288 = vunpack.c.l.b16 %v235
    %v289 = vunpack.c.h.b16 %v235
    %v290 = vunpack.c.l.b16 %v236
    %v291 = vunpack.c.h.b16 %v236
    %v292 = vunpack.c.l.b16 %v237
    %v293 = vunpack.c.h.b16 %v237
    %v294 = vunpack.c.l.b16 %v238
    %v295 = vunpack.c.h.b16 %v238
    %v296 = vunpack.c.l.b16 %v239
    %v297 = vunpack.c.h.b16 %v239
    %v298 = vunpack.c.l.b16 %v240
    %v299 = vunpack.c.h.b16 %v240
    %v300 = vunpack.c.l.b16 %v241
    %v301 = vunpack.c.h.b16 %v241
    %v302 = vpack.c.b16 %v272, %v270
    %v303 = vpack.c.b16 %v273, %v271
    %v304 = vpack.c.b16 %v276, %v274
    %v305 = vpack.c.b16 %v277, %v275
    %v306 = vpack.c.b16 %v280, %v278
    %v307 = vpack.c.b16 %v281, %v279
    %v308 = vpack.c.b16 %v284, %v282
    %v309 = vpack.c.b16 %v285, %v283
    %v310 = vpack.c.b16 %v288, %v286
    %v311 = vpack.c.b16 %v289, %v287
    %v312 = vpack.c.b16 %v292, %v290
    %v313 = vpack.c.b16 %v293, %v291
    %v314 = vpack.c.b16 %v296, %v294
    %v315 = vpack.c.b16 %v297, %v295
    %v316 = vpack.c.b16 %v300, %v298
    %v317 = vpack.c.b16 %v301, %v299
    %334 = vmatprep.subr.bf16.mxu0 %v303
    %335 = vmatpush1.bf16.msra.mxu0 %v302
    %336 = vmatprep.subr.bf16.mxu0 %v305
    %337 = vmatpush1.bf16.msra.mxu0 %v304
    %338 = vmatprep.subr.bf16.mxu0 %v307
    %339 = vmatpush1.bf16.msra.mxu0 %v306
    %340 = vmatprep.subr.bf16.mxu0 %v309
    %341 = vmatpush1.bf16.msra.mxu0 %v308
    %342 = vmatprep.subr.bf16.mxu0 %v311
    %343 = vmatpush1.bf16.msra.mxu0 %v310
    %344 = vmatprep.subr.bf16.mxu0 %v313
    %345 = vmatpush1.bf16.msra.mxu0 %v312
    %346 = vmatprep.subr.bf16.mxu0 %v315
    %347 = vmatpush1.bf16.msra.mxu0 %v314
    %348 = vmatprep.subr.bf16.mxu0 %v317
    %349 = vmatpush1.bf16.msra.mxu0 %v316
    %350 = vmatprep.subr.bf16.mxu0 0
    %351 = vmatpush1.bf16.msra.mxu0 0
    %352 = vmatprep.subr.bf16.mxu0 0
    %353 = vmatpush1.bf16.msra.mxu0 0
    %354 = vmatprep.subr.bf16.mxu0 0
    %355 = vmatpush1.bf16.msra.mxu0 0
    %356 = vmatprep.subr.bf16.mxu0 0
    %357 = vmatpush1.bf16.msra.mxu0 0
    %358 = vmatprep.subr.bf16.mxu0 0
    %359 = vmatpush1.bf16.msra.mxu0 0
    %360 = vmatprep.subr.bf16.mxu0 0
    %361 = vmatpush1.bf16.msra.mxu0 0
    %362 = vmatprep.subr.bf16.mxu0 0
    %363 = vmatpush1.bf16.msra.mxu0 0
    %364 = vmatprep.subr.bf16.mxu0 0
    %365 = vmatpush1.bf16.msra.mxu0 0
    %366 = vmatprep.mubr.bf16.mxu0 0
    %367 = vmatmul.mubr.bf16.gmra.mrb[0].mxu0 %v224
    %v368 = vpop.f32.mrb[0].mxu0
    %v369 = vadd.f32 %v247, %v368
    %v370 = vpop.f32.mrb[0].mxu0
    %v371 = vadd.f32 %v251, %v370
    %v372 = vpop.f32.mrb[0].mxu0
    %v373 = vadd.f32 %v247, %v372
    %v374 = vpop.f32.mrb[0].mxu0
    %v375 = vadd.f32 %v251, %v374
    %376 = vmatprep.mubr.bf16.mxu0 0
    %377 = vmatmul.mubr.bf16.gmra.mrb[0].mxu0 %v225
    %v378 = vpop.f32.mrb[0].mxu0
    %v379 = vadd.f32 %v247, %v378
    %v380 = vpop.f32.mrb[0].mxu0
    %v381 = vadd.f32 %v251, %v380
    %v382 = vpop.f32.mrb[0].mxu0
    %v383 = vadd.f32 %v247, %v382
    %v384 = vpop.f32.mrb[0].mxu0
    %v385 = vadd.f32 %v251, %v384
    %386 = vdwg.mxu0
    %v387 = vmax.f32 %v369, 0.0
    %v388 = vmax.f32 %v373, 0.0
    %v389 = vmax.f32 %v379, 0.0
    %v390 = vmax.f32 %v383, 0.0
    %v391 = vpack.c.bf16 %v388, %v387
    %v392 = vpack.c.bf16 %v390, %v389
    %v393 = vld [vmem:[#allocation7] sm:$0xf]
    %v394 = vld [vmem:[#allocation7 + $0x4] sm:$0xf]
    %v395 = vld [vmem:[#allocation7 + $0x8] sm:$0xf]
    %v396 = vld [vmem:[#allocation7 + $0xc] sm:$0xf]
    %v397 = vld [vmem:[#allocation7 + $0x10] sm:$0xf]
    %v398 = vld [vmem:[#allocation7 + $0x14] sm:$0xf]
    %v399 = vld [vmem:[#allocation7 + $0x18] sm:$0xf]
    %v400 = vld [vmem:[#allocation7 + $0x1c] sm:$0xf]
    %v401 = vld [vmem:[#allocation7 + $0x20] sm:$0xf]
    %v402 = vld [vmem:[#allocation7 + $0x24] sm:$0xf]
    %v403 = vld [vmem:[#allocation7 + $0x28] sm:$0xf]
    %v404 = vld [vmem:[#allocation7 + $0x2c] sm:$0xf]
    %v405 = vld [vmem:[#allocation7 + $0x30] sm:$0xf]
    %v406 = vld [vmem:[#allocation7 + $0x34] sm:$0xf]
    %v407 = vld [vmem:[#allocation7 + $0x38] sm:$0xf]
    %v408 = vld [vmem:[#allocation7 + $0x3c] sm:$0xf]
    %v409 = vld [vmem:[%s6] sm:$0x1]
    %v411 = vlaneseq
    %v412 = vshrl.u32 %v411, 7
    %v413 = vsub.s32 0, %v412
    %v414 = vrot.slane %v409, %v413
    %v432 = vunpack.c.l.b16 %v393
    %v433 = vunpack.c.l.b16 %v394
    %v434 = vunpack.c.l.b16 %v395
    %v435 = vunpack.c.l.b16 %v396
    %v436 = vunpack.c.l.b16 %v397
    %v437 = vunpack.c.l.b16 %v398
    %v438 = vunpack.c.l.b16 %v399
    %v439 = vunpack.c.l.b16 %v400
    %v440 = vunpack.c.l.b16 %v401
    %v441 = vunpack.c.l.b16 %v402
    %v442 = vunpack.c.l.b16 %v403
    %v443 = vunpack.c.l.b16 %v404
    %v444 = vunpack.c.l.b16 %v405
    %v445 = vunpack.c.l.b16 %v406
    %v446 = vunpack.c.l.b16 %v407
    %v447 = vunpack.c.l.b16 %v408
    %v448 = vpack.c.b16 %v433, %v432
    %v449 = vpack.c.b16 %v435, %v434
    %v450 = vpack.c.b16 %v437, %v436
    %v451 = vpack.c.b16 %v439, %v438
    %v452 = vpack.c.b16 %v441, %v440
    %v453 = vpack.c.b16 %v443, %v442
    %v454 = vpack.c.b16 %v445, %v444
    %v455 = vpack.c.b16 %v447, %v446
    %464 = vmatprep.subr.bf16.mxu0 0
    %465 = vmatpush1.bf16.msra.mxu0 %v448
    %466 = vmatprep.subr.bf16.mxu0 0
    %467 = vmatpush1.bf16.msra.mxu0 %v449
    %468 = vmatprep.subr.bf16.mxu0 0
    %469 = vmatpush1.bf16.msra.mxu0 %v450
    %470 = vmatprep.subr.bf16.mxu0 0
    %471 = vmatpush1.bf16.msra.mxu0 %v451
    %472 = vmatprep.subr.bf16.mxu0 0
    %473 = vmatpush1.bf16.msra.mxu0 %v452
    %474 = vmatprep.subr.bf16.mxu0 0
    %475 = vmatpush1.bf16.msra.mxu0 %v453
    %476 = vmatprep.subr.bf16.mxu0 0
    %477 = vmatpush1.bf16.msra.mxu0 %v454
    %478 = vmatprep.subr.bf16.mxu0 0
    %479 = vmatpush1.bf16.msra.mxu0 %v455
    %480 = vmatprep.subr.bf16.mxu0 0
    %481 = vmatpush1.bf16.msra.mxu0 0
    %482 = vmatprep.subr.bf16.mxu0 0
    %483 = vmatpush1.bf16.msra.mxu0 0
    %484 = vmatprep.subr.bf16.mxu0 0
    %485 = vmatpush1.bf16.msra.mxu0 0
    %486 = vmatprep.subr.bf16.mxu0 0
    %487 = vmatpush1.bf16.msra.mxu0 0
    %488 = vmatprep.subr.bf16.mxu0 0
    %489 = vmatpush1.bf16.msra.mxu0 0
    %490 = vmatprep.subr.bf16.mxu0 0
    %491 = vmatpush1.bf16.msra.mxu0 0
    %492 = vmatprep.subr.bf16.mxu0 0
    %493 = vmatpush1.bf16.msra.mxu0 0
    %494 = vmatprep.subr.bf16.mxu0 0
    %495 = vmatpush1.bf16.msra.mxu0 0
    %496 = vmatprep.mubr.bf16.mxu0 0
    %497 = vmatmul.mubr.bf16.gmra.mrb[0].mxu0 %v391
    %v498 = vpop.f32.mrb[0].mxu0
    %v499 = vadd.f32 %v414, %v498
    %v500 = vpop.f32.mrb[0].mxu0
    %v501 = vpop.f32.mrb[0].mxu0
    %v502 = vadd.f32 %v414, %v501
    %v503 = vpop.f32.mrb[0].mxu0
    %504 = vmatprep.mubr.bf16.mxu0 0
    %505 = vmatmul.mubr.bf16.gmra.mrb[0].mxu0 %v392
    %v506 = vpop.f32.mrb[0].mxu0
    %v507 = vadd.f32 %v414, %v506
    %v508 = vpop.f32.mrb[0].mxu0
    %v509 = vpop.f32.mrb[0].mxu0
    %v510 = vadd.f32 %v414, %v509
    %v511 = vpop.f32.mrb[0].mxu0
    %512 = vdwg.mxu0
    %vm513 = vcmask 7168
    %514 = vst.msk [vmem:[%s7] sm:$0xff] %vm513, %v371
    %515 = vst.msk [vmem:[%s7 + $0x8] sm:$0xff] %vm513, %v375
    %516 = vst.msk [vmem:[%s7 + $0x10] sm:$0xff] %vm513, %v381
    %517 = vst.msk [vmem:[%s7 + $0x18] sm:$0xff] %vm513, %v385
    %518 = vst.msk [vmem:[%s8] sm:$0xff] %vm513, %v499
    %519 = vst.msk [vmem:[%s8 + $0x8] sm:$0xff] %vm513, %v502
    %520 = vst.msk [vmem:[%s8 + $0x10] sm:$0xff] %vm513, %v507
    %521 = vst.msk [vmem:[%s8 + $0x18] sm:$0xff] %vm513, %v510
    // Predicated region
    $region46: #{tpu_custom_call.1} parent=1 // pred_check
      _
    $region47: #{tpu_custom_call.1} parent=1 // pred_check_branch
      %523 = sbr.rel (0) target = $region49
    $region48: #{tpu_custom_call.1} parent=1 // pred_region
      _
    $region49: #{tpu_custom_call.1} parent=1 // pred_fallthru
      _
    // Predicated region
    $region50: #{tpu_custom_call.1} parent=1 // pred_check
      _
    $region51: #{tpu_custom_call.1} parent=1 // pred_check_branch
      %525 = sbr.rel (0) target = $region53
    $region52: #{tpu_custom_call.1} parent=1 // pred_region
      _
    $region53: #{tpu_custom_call.1} parent=1 // pred_fallthru
      _
    // Predicated region
    $region54: #{tpu_custom_call.1} parent=1 // pred_check
      _
    $region55: #{tpu_custom_call.1} parent=1 // pred_check_branch
      %527 = sbr.rel (0) target = $region57
    $region56: #{tpu_custom_call.1} parent=1 // pred_region
      _
    $region57: #{tpu_custom_call.1} parent=1 // pred_fallthru
      _
    // Predicated region
    $region58: #{tpu_custom_call.1} parent=1 // pred_check
      _
    $region59: #{tpu_custom_call.1} parent=1 // pred_check_branch
      %529 = sbr.rel (0) target = $region61
    $region60: #{tpu_custom_call.1} parent=1 // pred_region
      _
    $region61: #{tpu_custom_call.1} parent=1 // pred_fallthru
      _
    %530 = vsyncpa [#allocation3], 1
    %531 = vsyncpa [#allocation5], 1
    %532 = vsyncpa [#allocation8], 1

</llo_original>
